<compile_context>
chip_gen: v7x
topology: tpu7x:2x2x1
jax: 0.10.0
libtpu: 0.0.40
codegen_flags: <defaults>
</compile_context>

<pallas_src>
import math
import functools

import jax
import jax.numpy as jnp
from jax.experimental import pallas as pl
from jax.experimental.pallas import tpu as pltpu


_LANES = 128
_SUBLANES = 8


def _round_up(v, m):
    return ((v + m - 1) // m) * m


def _vmem_limit_bytes():
    """Generation-aware scoped-VMEM budget (~half of physical VMEM, capped)."""
    try:
        cap = int(pltpu.get_tpu_info().vmem_capacity_bytes)
    except Exception:
        return 32 * 1024 * 1024                      # safe fallback
    # v5e/v6e (128 MiB physical) -> 64 MiB; v7x (64 MiB physical) -> 32 MiB.
    return int(max(16 * 1024 * 1024, min(cap // 2, 64 * 1024 * 1024)))


def _pick_tile(dim, mult, cap):
    """Largest divisor of `dim` that is a multiple of `mult` and <= cap; else `dim`."""
    if dim % mult != 0:
        return dim
    best = mult
    t = mult
    while t <= min(dim, cap):
        if dim % t == 0:
            best = t
        t += mult
    return best


# ----------------------------------------------------------------------------
# Fused single-pass batch-norm (training, input small enough for VMEM).
# ----------------------------------------------------------------------------
def _fused_train_kernel(x_ref, gamma_ref, beta_ref, y_ref, mean_ref, var_ref,
                        *, count, eps):
    x = x_ref[...].astype(jnp.float32)                           # (N, C, HW)
    s = jnp.sum(jnp.sum(x, axis=2, keepdims=True), axis=0)       # (C, 1)
    q = jnp.sum(jnp.sum(x * x, axis=2, keepdims=True), axis=0)   # (C, 1)
    inv_count = 1.0 / count
    mean = s * inv_count
    var = jnp.maximum(q * inv_count - mean * mean, 0.0)          # biased (norm)
    inv_std = jax.lax.rsqrt(var + eps)
    scale = gamma_ref[...] * inv_std                             # (C, 1)
    shift = beta_ref[...] - mean * scale                         # (C, 1)
    y_ref[...] = (x * scale[None, :, :] + shift[None, :, :]).astype(y_ref.dtype)
    mean_ref[...] = mean
    var_ref[...] = var


# ----------------------------------------------------------------------------
# Tiled pass 1: per-row partial sum / sum-of-squares, accumulated directly
# into the resident output blocks (out block index is (ri, 0) for every hi).
# ----------------------------------------------------------------------------
def _stats_kernel(x_ref, psum_ref, psq_ref, *, acc_lanes):
    hi = pl.program_id(1)                 # reduction axis (last in grid)

    @pl.when(hi == 0)
    def _():
        psum_ref[...] = jnp.zeros_like(psum_ref)
        psq_ref[...] = jnp.zeros_like(psq_ref)

    # Static chunk loop with static slices: each chunk value dies at the end of
    # its iteration, so live vregs stay ~= 2*(row_tile/8) accumulators (<=16 at
    # row_tile=64) + one 128-lane chunk; no dynamic lane-dim slicing needed.
    n_chunks = x_ref.shape[1] // acc_lanes
    s = psum_ref[...]
    q = psq_ref[...]
    for j in range(n_chunks):
        c = x_ref[:, j * acc_lanes:(j + 1) * acc_lanes].astype(jnp.float32)
        s = s + c
        q = q + c * c
    psum_ref[...] = s
    psq_ref[...] = q


# ----------------------------------------------------------------------------
# Tiled pass 2: y = x * scale + shift (affine folded into per-row constants).
# ----------------------------------------------------------------------------
def _norm_kernel(x_ref, scale_ref, shift_ref, y_ref, *, row_tile, resident):
    if resident:
        # scale/shift refs hold the FULL (NC_pad, 1) arrays (one DMA, resident
        # for the whole pass); pick this tile's rows with a sublane slice.
        r0 = pl.multiple_of(pl.program_id(0) * row_tile, _SUBLANES)
        scale = scale_ref[pl.ds(r0, row_tile), :]
        shift = shift_ref[pl.ds(r0, row_tile), :]
    else:
        scale = scale_ref[...]
        shift = shift_ref[...]
    x = x_ref[...].astype(jnp.float32)
    y_ref[...] = (x * scale + shift).astype(y_ref.dtype)


def _update_running(mean, var_biased, running_mean, running_var, momentum, count):
    # TODO(synk): count==1 uses max(count-1,1); PyTorch produces inf/NaN there.
    unbiased = var_biased * (count / max(count - 1.0, 1.0))
    new_rm = (1.0 - momentum) * running_mean + momentum * mean
    new_rv = (1.0 - momentum) * running_var + momentum * unbiased
    return new_rm, new_rv


def batch_norm_pallas(x_nchw, gamma, beta, running_mean, running_var, *,
                      eps=1e-5, momentum=0.1, training=True, allow_fused=True):
    """Batch-norm over NCHW input. Returns (y_nchw, new_running_mean, new_running_var)."""
    N, C, H, W = x_nchw.shape
    HW = H * W
    NC = N * C
    count = float(N * HW)
    in_dtype = x_nchw.dtype

    vmem_limit = _vmem_limit_bytes()
    block_budget = vmem_limit // 8        # per-block bytes; 4 live buffers ~ half limit

    gamma32 = gamma.astype(jnp.float32)
    beta32 = beta.astype(jnp.float32)
    rm32 = running_mean.astype(jnp.float32)
    rv32 = running_var.astype(jnp.float32)

    # ---------------- fused single-pass path (small feature maps, training) --------
    padded_elems = N * _round_up(C, _SUBLANES) * _round_up(HW, _LANES)
    itemsize = jnp.dtype(in_dtype).itemsize
    fused_vmem = padded_elems * (2 * itemsize + 8)     # x + y blocks + f32 temps
    if training and allow_fused and fused_vmem <= vmem_limit // 2:
        x3 = x_nchw.reshape(N, C, HW)                  # free reshape
        y3, mean2, var2 = pl.pallas_call(
            functools.partial(_fused_train_kernel, count=count, eps=eps),
            out_shape=(jax.ShapeDtypeStruct((N, C, HW), in_dtype),
                       jax.ShapeDtypeStruct((C, 1), jnp.float32),
                       jax.ShapeDtypeStruct((C, 1), jnp.float32)),
            compiler_params=pltpu.CompilerParams(vmem_limit_bytes=vmem_limit),
        )(x3, gamma32.reshape(C, 1), beta32.reshape(C, 1))
        mean = mean2[:, 0]
        var = var2[:, 0]
        new_rm, new_rv = _update_running(mean, var, rm32, rv32, momentum, count)
        return y3.reshape(N, C, H, W), new_rm, new_rv

    # ---------------- tiled two-pass path -------------------------------------------
    # Free reshape: NCHW -> (N*C, H*W). Row r <-> (n, c) = divmod(r, C).
    x2 = x_nchw.reshape(NC, HW)
    NC_pad = _round_up(NC, _SUBLANES)
    HW_pad = _round_up(HW, _LANES)
    if NC_pad != NC or HW_pad != HW:
        # Zero padding keeps every tile lane/sublane dense; zeros contribute 0
        # to sum/sumsq so statistics stay exact (true count is used below).
        # TODO(synk): masked-tail kernels would avoid this extra HBM pad/slice copy.
        x2 = jnp.pad(x2, ((0, NC_pad - NC), (0, HW_pad - HW)))

    if training:
        # Stats pass tiles: small row tile (vreg pressure), wide lane tile (DMA).
        row_cap_s = min(64, NC_pad // 2) if NC_pad >= 2 * _SUBLANES else NC_pad
        row_tile_s = _pick_tile(NC_pad, _SUBLANES, row_cap_s)
        hw_cap_s = min(8192, max(_LANES,
                                 (block_budget // (row_tile_s * 4)) // _LANES * _LANES))
        hw_tile_s = _pick_tile(HW_pad, _LANES, hw_cap_s)

        psum, psq = pl.pallas_call(
            functools.partial(_stats_kernel, acc_lanes=_LANES),
            out_shape=(jax.ShapeDtypeStruct((NC_pad, _LANES), jnp.float32),
                       jax.ShapeDtypeStruct((NC_pad, _LANES), jnp.float32)),
            grid=(NC_pad // row_tile_s, HW_pad // hw_tile_s),
            in_specs=[pl.BlockSpec((row_tile_s, hw_tile_s), lambda ri, hi: (ri, hi))],
            out_specs=(pl.BlockSpec((row_tile_s, _LANES), lambda ri, hi: (ri, 0)),
                       pl.BlockSpec((row_tile_s, _LANES), lambda ri, hi: (ri, 0))),
            compiler_params=pltpu.CompilerParams(
                dimension_semantics=("parallel", "arbitrary"),
                vmem_limit_bytes=vmem_limit),
        )(x2)

        # Tiny (C,)-sized finalize in plain JAX (negligible vs. the x passes).
        # TODO(synk): for extremely large N*H*W switch to centered/Welford merges
        # to avoid E[x^2]-E[x]^2 cancellation in f32.
        ch_sum = psum[:NC].reshape(N, C, _LANES).sum(axis=(0, 2))
        ch_sq = psq[:NC].reshape(N, C, _LANES).sum(axis=(0, 2))
        mean = ch_sum / count
        var = jnp.maximum(ch_sq / count - mean * mean, 0.0)      # biased (norm)
        new_rm, new_rv = _update_running(mean, var, rm32, rv32, momentum, count)
    else:
        mean, var = rm32, rv32
        new_rm, new_rv = running_mean, running_var

    inv_std = jax.lax.rsqrt(var + eps)
    scale = gamma32 * inv_std                          # (C,)
    shift = beta32 - mean * scale                      # (C,)
    scale_rows = jnp.broadcast_to(scale[None, :], (N, C)).reshape(NC, 1)
    shift_rows = jnp.broadcast_to(shift[None, :], (N, C)).reshape(NC, 1)
    if NC_pad != NC:
        scale_rows = jnp.pad(scale_rows, ((0, NC_pad - NC), (0, 0)))
        shift_rows = jnp.pad(shift_rows, ((0, NC_pad - NC), (0, 0)))

    # Normalize pass tiles: big lane-dense blocks sized to ~block_budget.
    hw_tile = _pick_tile(HW_pad, _LANES, 4096)
    row_cap_n = max(_SUBLANES,
                    min(512, (block_budget // (hw_tile * 4)) // _SUBLANES * _SUBLANES))
    row_tile = _pick_tile(NC_pad, _SUBLANES, row_cap_n)

    # Keep the per-row affine constants fully VMEM-resident (one DMA, constant
    # index_map) when they are small; otherwise stream (row_tile,1) blocks.
    resident = NC_pad * 512 <= 2 * 1024 * 1024   # (NC_pad,1) f32 ~= NC_pad/8 (8,128) tiles
    if resident:
        ss_spec = pl.BlockSpec((NC_pad, 1), lambda ri, hi: (0, 0))
    else:
        ss_spec = pl.BlockSpec((row_tile, 1), lambda ri, hi: (ri, 0))

    y2 = pl.pallas_call(
        functools.partial(_norm_kernel, row_tile=row_tile, resident=resident),
        out_shape=jax.ShapeDtypeStruct((NC_pad, HW_pad), in_dtype),
        grid=(NC_pad // row_tile, HW_pad // hw_tile),
        in_specs=[pl.BlockSpec((row_tile, hw_tile), lambda ri, hi: (ri, hi)),
                  ss_spec, ss_spec],
        out_specs=pl.BlockSpec((row_tile, hw_tile), lambda ri, hi: (ri, hi)),
        compiler_params=pltpu.CompilerParams(
            dimension_semantics=("parallel", "parallel"),
            vmem_limit_bytes=vmem_limit),
    )(x2, scale_rows, shift_rows)

    if NC_pad != NC or HW_pad != HW:
        y2 = y2[:NC, :HW]
    return y2.reshape(N, C, H, W), new_rm, new_rv


# ----------------------------------------------------------------------------
# BayesianBatchNorm2d: deterministic parameter setup + forward wrapper.
# ----------------------------------------------------------------------------
def inverse_softplus(x):
    return math.log(math.exp(x) - 1.0)


class BayesianBatchNorm2d:
    def __init__(self, num_features, prior_stddev=0.01, eps=1e-5, momentum=0.1):
        C = num_features
        self.eps = eps
        self.momentum = momentum
        # nn.BatchNorm2d default init: weight=1, bias=0, running_mean=0, running_var=1
        self.posterior_mean_weight = jnp.ones((C,), jnp.float32)
        self.posterior_mean_bias = jnp.zeros((C,), jnp.float32)
        rho0 = inverse_softplus(prior_stddev)
        self.posterior_rho_weight = jnp.full((C,), rho0, jnp.float32)
        self.posterior_rho_bias = jnp.full((C,), rho0, jnp.float32)
        self.running_mean = jnp.zeros((C,), jnp.float32)
        self.running_var = jnp.ones((C,), jnp.float32)
        self.training = True
        # TODO(synk): momentum=None (cumulative 1/num_batches_tracked averaging)
        # from the PyTorch module is not modeled; fixed momentum is used.

    def perturb_posterior(self, key):
        kw, kb = jax.random.split(key, 2)
        noise_w = jax.random.normal(kw, self.posterior_mean_weight.shape, jnp.float32)
        noise_b = jax.random.normal(kb, self.posterior_mean_bias.shape, jnp.float32)
        gamma = self.posterior_mean_weight + jax.nn.softplus(self.posterior_rho_weight) * noise_w
        beta = self.posterior_mean_bias + jax.nn.softplus(self.posterior_rho_bias) * noise_b
        return gamma, beta

    def forward(self, x, mode, key=None, allow_fused=True):
        if x.ndim != 4:
            raise ValueError(f"expected 4D input (got {x.ndim}D input)")
        if mode == 'MC':
            gamma, beta = self.perturb_posterior(key)
        elif mode == 'MAP':
            gamma, beta = self.posterior_mean_weight, self.posterior_mean_bias
        else:
            raise ValueError(mode)
        y, new_rm, new_rv = batch_norm_pallas(
            x, gamma, beta, self.running_mean, self.running_var,
            eps=self.eps, momentum=self.momentum, training=self.training,
            allow_fused=allow_fused)
        if self.training:
            self.running_mean, self.running_var = new_rm, new_rv
        return y


# ----------------------------------------------------------------------------
# Pure-JAX reference for correctness check.
# ----------------------------------------------------------------------------
def _ref_batch_norm(x, gamma, beta, rm, rv, eps, training):
    if training:
        mean = x.mean(axis=(0, 2, 3))
        var = x.var(axis=(0, 2, 3))          # biased, as used for normalization
    else:
        mean, var = rm, rv
    xhat = (x - mean[None, :, None, None]) * jax.lax.rsqrt(var[None, :, None, None] + eps)
    return xhat * gamma[None, :, None, None] + beta[None, :, None, None]


if __name__ == "__main__":
    key = jax.random.PRNGKey(0)
    k_x, k_noise, k_x2 = jax.random.split(key, 3)

    N, C, H, W = 2, 4, 16, 16
    x = jax.random.normal(k_x, (N, C, H, W), jnp.float32)

    layer = BayesianBatchNorm2d(num_features=C, prior_stddev=0.01)

    # --- MC mode, training (fused single-pass path) ---
    gamma_mc, beta_mc = layer.perturb_posterior(k_noise)
    y_mc = layer.forward(x, mode='MC', key=k_noise)
    jax.block_until_ready(y_mc)
    ref_mc = _ref_batch_norm(x, gamma_mc, beta_mc,
                             jnp.zeros((C,)), jnp.ones((C,)), 1e-5, True)
    assert bool(jnp.allclose(y_mc, ref_mc, atol=1e-4, rtol=1e-4))

    # Running-stat update check (PyTorch semantics: unbiased var, momentum=0.1).
    bmean = x.mean(axis=(0, 2, 3))
    bvar_unbiased = x.var(axis=(0, 2, 3), ddof=1)
    exp_rm = 0.9 * jnp.zeros((C,)) + 0.1 * bmean
    exp_rv = 0.9 * jnp.ones((C,)) + 0.1 * bvar_unbiased
    assert bool(jnp.allclose(layer.running_mean, exp_rm, atol=1e-4, rtol=1e-4))
    assert bool(jnp.allclose(layer.running_var, exp_rv, atol=1e-4, rtol=1e-4))

    # --- MAP mode, training (tiled two-pass path: stats + normalize) ---
    y_map = layer.forward(x, mode='MAP', allow_fused=False)
    jax.block_until_ready(y_map)
    ref_map = _ref_batch_norm(x, layer.posterior_mean_weight, layer.posterior_mean_bias,
                              jnp.zeros((C,)), jnp.ones((C,)), 1e-5, True)
    assert bool(jnp.allclose(y_map, ref_map, atol=1e-4, rtol=1e-4))

    # --- MAP mode, eval (running statistics, normalize-only pass) ---
    rm_eval, rv_eval = layer.running_mean, layer.running_var
    layer.training = False
    y_eval = layer.forward(x, mode='MAP')
    jax.block_until_ready(y_eval)
    ref_eval = _ref_batch_norm(x, layer.posterior_mean_weight, layer.posterior_mean_bias,
                               rm_eval, rv_eval, 1e-5, False)
    assert bool(jnp.allclose(y_eval, ref_eval, atol=1e-4, rtol=1e-4))

    # --- Odd shapes (C < 8 sublanes, H*W not a multiple of 128): fused + padded tiled ---
    N2, C2, H2, W2 = 2, 3, 7, 7
    x_odd = jax.random.normal(k_x2, (N2, C2, H2, W2), jnp.float32)
    g2 = jnp.full((C2,), 1.3, jnp.float32)
    b2 = jnp.full((C2,), -0.2, jnp.float32)
    ref_odd = _ref_batch_norm(x_odd, g2, b2, jnp.zeros((C2,)), jnp.ones((C2,)), 1e-5, True)
    y_f, _, _ = batch_norm_pallas(x_odd, g2, b2, jnp.zeros((C2,)), jnp.ones((C2,)),
                                  eps=1e-5, momentum=0.1, training=True, allow_fused=True)
    y_t, _, _ = batch_norm_pallas(x_odd, g2, b2, jnp.zeros((C2,)), jnp.ones((C2,)),
                                  eps=1e-5, momentum=0.1, training=True, allow_fused=False)
    jax.block_until_ready((y_f, y_t))
    assert bool(jnp.allclose(y_f, ref_odd, atol=1e-4, rtol=1e-4))
    assert bool(jnp.allclose(y_t, ref_odd, atol=1e-4, rtol=1e-4))

    print("KERNEL_OK")
</pallas_src>

<mosaic_0001>
module attributes {stable_mosaic.version = 11 : i64} {
  func.func @_fused_train_kernel(%arg0: memref<2x4x256xf32, #tpu.memory_space<vmem>>, %arg1: memref<4x1xf32, #tpu.memory_space<vmem>>, %arg2: memref<4x1xf32, #tpu.memory_space<vmem>>, %arg3: memref<2x4x256xf32, #tpu.memory_space<vmem>>, %arg4: memref<4x1xf32, #tpu.memory_space<vmem>>, %arg5: memref<4x1xf32, #tpu.memory_space<vmem>>) attributes {dimension_semantics = [], scalar_prefetch = 0 : i64, scratch_operands = 0 : i64, tpu.core_type = #tpu.core_type<tc>} {
    %c0 = arith.constant 0 : index
    %c0_0 = arith.constant 0 : index
    %c0_1 = arith.constant 0 : index
    %0 = vector.load %arg0[%c0, %c0_0, %c0_1] : memref<2x4x256xf32, #tpu.memory_space<vmem>>, vector<2x4x256xf32>
    %cst = arith.constant dense<0.000000e+00> : vector<2x4xf32>
    %1 = vector.multi_reduction <add>, %0, %cst [2] : vector<2x4x256xf32> to vector<2x4xf32>
    %2 = vector.shape_cast %1 : vector<2x4xf32> to vector<2x4x1xf32>
    %cst_2 = arith.constant dense<0.000000e+00> : vector<4x1xf32>
    %3 = vector.multi_reduction <add>, %2, %cst_2 [0] : vector<2x4x1xf32> to vector<4x1xf32>
    %4 = arith.mulf %0, %0 : vector<2x4x256xf32>
    %cst_3 = arith.constant dense<0.000000e+00> : vector<2x4xf32>
    %5 = vector.multi_reduction <add>, %4, %cst_3 [2] : vector<2x4x256xf32> to vector<2x4xf32>
    %6 = vector.shape_cast %5 : vector<2x4xf32> to vector<2x4x1xf32>
    %cst_4 = arith.constant dense<0.000000e+00> : vector<4x1xf32>
    %7 = vector.multi_reduction <add>, %6, %cst_4 [0] : vector<2x4x1xf32> to vector<4x1xf32>
    %cst_5 = arith.constant 0.001953125 : f32
    %8 = vector.broadcast %cst_5 : f32 to vector<4x1xf32>
    %9 = arith.mulf %3, %8 : vector<4x1xf32>
    %cst_6 = arith.constant 0.001953125 : f32
    %10 = vector.broadcast %cst_6 : f32 to vector<4x1xf32>
    %11 = arith.mulf %7, %10 : vector<4x1xf32>
    %12 = arith.mulf %9, %9 : vector<4x1xf32>
    %13 = arith.subf %11, %12 : vector<4x1xf32>
    %cst_7 = arith.constant 0.000000e+00 : f32
    %14 = vector.broadcast %cst_7 : f32 to vector<4x1xf32>
    %15 = arith.maximumf %13, %14 : vector<4x1xf32>
    %cst_8 = arith.constant 9.99999974E-6 : f32
    %16 = vector.broadcast %cst_8 : f32 to vector<4x1xf32>
    %17 = arith.addf %15, %16 : vector<4x1xf32>
    %18 = math.rsqrt %17 : vector<4x1xf32>
    %c0_9 = arith.constant 0 : index
    %c0_10 = arith.constant 0 : index
    %19 = vector.load %arg1[%c0_9, %c0_10] : memref<4x1xf32, #tpu.memory_space<vmem>>, vector<4x1xf32>
    %20 = arith.mulf %19, %18 : vector<4x1xf32>
    %c0_11 = arith.constant 0 : index
    %c0_12 = arith.constant 0 : index
    %21 = vector.load %arg2[%c0_11, %c0_12] : memref<4x1xf32, #tpu.memory_space<vmem>>, vector<4x1xf32>
    %22 = arith.mulf %9, %20 : vector<4x1xf32>
    %23 = arith.subf %21, %22 : vector<4x1xf32>
    %24 = vector.shape_cast %20 : vector<4x1xf32> to vector<1x4x1xf32>
    %25 = vector.broadcast %24 : vector<1x4x1xf32> to vector<2x4x256xf32>
    %26 = arith.mulf %0, %25 : vector<2x4x256xf32>
    %27 = vector.shape_cast %23 : vector<4x1xf32> to vector<1x4x1xf32>
    %28 = vector.broadcast %27 : vector<1x4x1xf32> to vector<2x4x256xf32>
    %29 = arith.addf %26, %28 : vector<2x4x256xf32>
    %c0_13 = arith.constant 0 : index
    %c0_14 = arith.constant 0 : index
    %c0_15 = arith.constant 0 : index
    %30 = vector.load %arg3[%c0_13, %c0_14, %c0_15] : memref<2x4x256xf32, #tpu.memory_space<vmem>>, vector<2x4x256xf32>
    tpu.vector_store %arg3[%c0_13, %c0_14, %c0_15], %29 {strides = array<i32>} : memref<2x4x256xf32, #tpu.memory_space<vmem>>, vector<2x4x256xf32>,
    %c0_16 = arith.constant 0 : index
    %c0_17 = arith.constant 0 : index
    %31 = vector.load %arg4[%c0_16, %c0_17] : memref<4x1xf32, #tpu.memory_space<vmem>>, vector<4x1xf32>
    tpu.vector_store %arg4[%c0_16, %c0_17], %9 {strides = array<i32>} : memref<4x1xf32, #tpu.memory_space<vmem>>, vector<4x1xf32>,
    %c0_18 = arith.constant 0 : index
    %c0_19 = arith.constant 0 : index
    %32 = vector.load %arg5[%c0_18, %c0_19] : memref<4x1xf32, #tpu.memory_space<vmem>>, vector<4x1xf32>
    tpu.vector_store %arg5[%c0_18, %c0_19], %15 {strides = array<i32>} : memref<4x1xf32, #tpu.memory_space<vmem>>, vector<4x1xf32>,
    return
  }
}

</mosaic_0001>

<llo_original>
// kernel: tpu_custom_call.1
$region0: #{tpu_custom_call.1}
  #allocation0 [shape = 'u32[]', space=smem, size = 0x4, offset = 0x4, fixed_abs, tag = 'smem constant byte address 0x4 - core index']
  #allocation1 [shape = 'u32[144,128]{1,0:T(1,128)}', space=vmem, size = 0x12000, scoped, tag = 'internal scratch']
  %s0 = inlined_call_operand.hbm [shape: f32[2,4,256], index: 0, kind: input, shape index: {}]
  %s1 = inlined_call_operand.vmem [shape: f32[4,1], index: 1, kind: input, shape index: {}]
  %s2 = inlined_call_operand.vmem [shape: f32[4,1], index: 2, kind: input, shape index: {}]
  %s3 = inlined_call_operand.hbm [shape: f32[2,4,256], index: 3, kind: output, shape index: {0}]
  %s4 = inlined_call_operand.vmem [shape: f32[4,1], index: 4, kind: output, shape index: {1}]
  %s5 = inlined_call_operand.vmem [shape: f32[4,1], index: 5, kind: output, shape index: {2}]
  %6 = xla_tuple %s3, %s4, %s5
  %s7 = sld [smem:[#allocation0]]
  $region42: #{tpu_custom_call.1} parent=0
    _
  %s9 = ssub.s32 1, %s7
  %s10 = scalar_select 0, %s9, %s7
  $region1: #{tpu_custom_call.1} parent=0
    #allocation2 [shape = 'u8[8192]{0}', space=vmem, size = 0x2000, scoped, tag = 'input window, operand 0, single buffered']
    #allocation3 [shape = 's32[1]{0}', space=sflag, size = 0x4, scoped, tag = 'scoped memory for tpu_custom_call.1']
    #allocation4 [shape = 's32[1]{0}', space=sflag, size = 0x4, scoped, tag = 'scoped memory for tpu_custom_call.1']
    #allocation5 [shape = 'u8[8192]{0}', space=vmem, size = 0x2000, scoped, tag = 'output window, operand 0, single buffered']
    %11 = vsyncpa [#allocation3], 0
    %12 = vsyncpa [#allocation4], 0
    // Predicated region
    $region2: #{tpu_custom_call.1} parent=1 // pred_check
      _
    $region3: #{tpu_custom_call.1} parent=1 // pred_check_branch
      %14 = sbr.rel (0) target = $region5
    $region4: #{tpu_custom_call.1} parent=1 // pred_region
      %s16 = ssub.s32 256, 256
      %17 = vsyncadd [#allocation3], %s16
      %s18 = sshll.u32 [#allocation2], 4
      %s19 = int_to_ptr.vmem [resolvable:$true] %s18
      %24 = dma.hbm_to_vmem [thread:$0]  %s0, 256, %s19, [#allocation3], 128, 128, 8
    $region5: #{tpu_custom_call.1} parent=1 // pred_fallthru
      _
    // Predicated region
    $region6: #{tpu_custom_call.1} parent=1 // pred_check
      _
    $region7: #{tpu_custom_call.1} parent=1 // pred_check_branch
      %26 = sbr.rel (0) target = $region9
    $region8: #{tpu_custom_call.1} parent=1 // pred_region
      _
    $region9: #{tpu_custom_call.1} parent=1 // pred_fallthru
      _
    // Predicated region
    $region10: #{tpu_custom_call.1} parent=1 // pred_check
      _
    $region11: #{tpu_custom_call.1} parent=1 // pred_check_branch
      %28 = sbr.rel (0) target = $region13
    $region12: #{tpu_custom_call.1} parent=1 // pred_region
      _
    $region13: #{tpu_custom_call.1} parent=1 // pred_fallthru
      _
    // Predicated region
    $region14: #{tpu_custom_call.1} parent=1 // pred_check
      _
    $region15: #{tpu_custom_call.1} parent=1 // pred_check_branch
      %30 = sbr.rel (0) target = $region17
    $region16: #{tpu_custom_call.1} parent=1 // pred_region
      %31 = dma.done [#allocation3], 256
    $region17: #{tpu_custom_call.1} parent=1 // pred_fallthru
      _
    %v32 = vld [vmem:[#allocation2] sm:$0xff]
    %v33 = vld [vmem:[#allocation2 + $0x8] sm:$0xff]
    %v36 = vcombine.high %v32, %v32
    %v37 = vcombine.high %v33, %v33
    %vm40 = vcmask 1043456
    %v41 = vsel %vm40, %v32, 0.0
    %v42 = vsel %vm40, %v36, 0.0
    %v43 = vadd.f32 %v41, %v42
    %44 = vadd.xlane.f32.xlu0 %v43
    %v45 = vpop.xlane.xlu0 %44
    %v46 = vsel %vm40, %v33, 0.0
    %v47 = vsel %vm40, %v37, 0.0
    %v48 = vadd.f32 %v46, %v47
    %49 = vadd.xlane.f32.xlu0 %v48
    %v50 = vpop.xlane.xlu0 %49
    %v51 = vsel %vm40, %v45, 0.0
    %v52 = vsel %vm40, %v50, 0.0
    %v53 = vadd.f32 %v51, %v52
    %v54 = vmul.f32 %v32, %v32
    %v55 = vmul.f32 %v33, %v33
    %v58 = vcombine.high %v54, %v54
    %v59 = vcombine.high %v55, %v55
    %v62 = vsel %vm40, %v54, 0.0
    %v63 = vsel %vm40, %v58, 0.0
    %v64 = vadd.f32 %v62, %v63
    %65 = vadd.xlane.f32.xlu0 %v64
    %v66 = vpop.xlane.xlu0 %65
    %v67 = vsel %vm40, %v55, 0.0
    %v68 = vsel %vm40, %v59, 0.0
    %v69 = vadd.f32 %v67, %v68
    %70 = vadd.xlane.f32.xlu0 %v69
    %v71 = vpop.xlane.xlu0 %70
    %v72 = vsel %vm40, %v66, 0.0
    %v73 = vsel %vm40, %v71, 0.0
    %v74 = vadd.f32 %v72, %v73
    %v75 = vmul.f32 %v53, 0.001953125
    %v76 = vmul.f32 %v74, 0.001953125
    %v77 = vmul.f32 %v75, %v75
    %v78 = vsub.f32 %v76, %v77
    %v79 = vmax.f32 %v78, 0.0
    %v80 = vadd.f32 %v79, 1e-05
    %v81 = vrsqrt.pop %v80
    %v82 = vld [vmem:[%s1] sm:$0xf]
    %v83 = vmul.f32 %v82, %v81
    %v84 = vld [vmem:[%s2] sm:$0xf]
    %v85 = vmul.f32 %v75, %v83
    %v86 = vsub.f32 %v84, %v85
    %88 = vset.pattern.permute.xlu0 0
    %89 = vperm.xlu0 %88, %v83
    %v90 = vpop.permute.xlu0 %89
    %v92 = vunpack.c.l.s4 839922192
    %v93 = vunpack.c.0.s8 %v92
    %v94 = vlaneseq
    %v95 = vshrl.u32 %v94, 7
    %v96 = vsub.s32 %v93, %v95
    %v97 = vrot.slane %v90, %v96
    %v99 = vmul.f32 %v32, %v97
    %v100 = vmul.f32 %v33, %v97
    %102 = vset.pattern.permute.xlu0 0
    %103 = vperm.xlu0 %102, %v86
    %v104 = vpop.permute.xlu0 %103
    %v106 = vunpack.c.l.s4 839922192
    %v107 = vunpack.c.0.s8 %v106
    %v108 = vlaneseq
    %v109 = vshrl.u32 %v108, 7
    %v110 = vsub.s32 %v107, %v109
    %v111 = vrot.slane %v104, %v110
    %v113 = vadd.f32 %v99, %v111
    %v114 = vadd.f32 %v100, %v111
    %115 = vst [vmem:[#allocation5] sm:$0xff] %v113
    %116 = vst [vmem:[#allocation5 + $0x8] sm:$0xff] %v114
    %vm117 = vcmask 3072
    %118 = vst.msk [vmem:[%s4] sm:$0xf] %vm117, %v75
    %119 = vst.msk [vmem:[%s5] sm:$0xf] %vm117, %v79
    // Predicated region
    $region18: #{tpu_custom_call.1} parent=1 // pred_check
      _
    $region19: #{tpu_custom_call.1} parent=1 // pred_check_branch
      %121 = sbr.rel (0) target = $region21
    $region20: #{tpu_custom_call.1} parent=1 // pred_region
      %s123 = ssub.s32 256, 256
      %124 = vsyncadd [#allocation4], %s123
      %s125 = sshll.u32 [#allocation5], 4
      %s126 = int_to_ptr.vmem [resolvable:$true] %s125
      %131 = dma.vmem_to_hbm [thread:$0]  %s126, 256, %s3, [#allocation4], 128, 128, 8
    $region21: #{tpu_custom_call.1} parent=1 // pred_fallthru
      _
    // Predicated region
    $region22: #{tpu_custom_call.1} parent=1 // pred_check
      _
    $region23: #{tpu_custom_call.1} parent=1 // pred_check_branch
      %133 = sbr.rel (0) target = $region25
    $region24: #{tpu_custom_call.1} parent=1 // pred_region
      _
    $region25: #{tpu_custom_call.1} parent=1 // pred_fallthru
      _
    // Predicated region
    $region26: #{tpu_custom_call.1} parent=1 // pred_check
      _
    $region27: #{tpu_custom_call.1} parent=1 // pred_check_branch
      %135 = sbr.rel (0) target = $region29
    $region28: #{tpu_custom_call.1} parent=1 // pred_region
      _
    $region29: #{tpu_custom_call.1} parent=1 // pred_fallthru
      _
    // Predicated region
    $region30: #{tpu_custom_call.1} parent=1 // pred_check
      _
    $region31: #{tpu_custom_call.1} parent=1 // pred_check_branch
      %137 = sbr.rel (0) target = $region33
    $region32: #{tpu_custom_call.1} parent=1 // pred_region
      %138 = dma.done [#allocation4], 256
    $region33: #{tpu_custom_call.1} parent=1 // pred_fallthru
      _
    // Predicated region
    $region34: #{tpu_custom_call.1} parent=1 // pred_check
      _
    $region35: #{tpu_custom_call.1} parent=1 // pred_check_branch
      %140 = sbr.rel (0) target = $region37
    $region36: #{tpu_custom_call.1} parent=1 // pred_region
      _
    $region37: #{tpu_custom_call.1} parent=1 // pred_fallthru
      _
    // Predicated region
    $region38: #{tpu_custom_call.1} parent=1 // pred_check
      _
    $region39: #{tpu_custom_call.1} parent=1 // pred_check_branch
      %142 = sbr.rel (0) target = $region41
    $region40: #{tpu_custom_call.1} parent=1 // pred_region
      _
    $region41: #{tpu_custom_call.1} parent=1 // pred_fallthru
      _
    %143 = vsyncpa [#allocation3], 1
    %144 = vsyncpa [#allocation4], 1

</llo_original>
